<compile_context>
chip_gen: v7x
topology: tpu7x:2x2x1
jax: 0.10.0
libtpu: 0.0.40
codegen_flags: <defaults>
</compile_context>

<pallas_src>
import functools
import math

import jax
import jax.numpy as jnp
from jax.experimental import pallas as pl
from jax.experimental.pallas import tpu as pltpu


_LANE = 128
_SUBLANE = 8
# Per-buffer block budget in *f32* bytes (bounds the in-kernel working set
# regardless of input dtype); the pipeline double-buffers this.
_BLOCK_F32_BYTES = 6 * 1024 * 1024
_VMEM_LIMIT_BYTES = 48 * 1024 * 1024   # comfortably below v7x's 64 MiB physical VMEM
_SMALL_INPUT_BYTES = 1 << 20           # below this, XLA's fused reduce beats a kernel launch


def _std_map_kernel(x_ref, o_ref):
    """Two-pass (numerically stable) std over the channel dim of one block."""
    # x_ref: (1, C, S_BLK, 128)  -- C is a major dim: the channel reduction is
    #                               pure VPU elementwise work across vregs.
    # o_ref: (1, S_BLK, 128)
    x = x_ref[...].astype(jnp.float32)            # f32 accumulation even for bf16 input
    c = x.shape[1]
    inv_nm1 = 1.0 / (c - 1) if c > 1 else float("nan")   # unbiased (torch.std default)
    mean = jnp.mean(x, axis=1, keepdims=True)
    d = x - mean
    var = jnp.sum(d * d, axis=1) * inv_nm1
    o_ref[...] = jnp.sqrt(var).astype(o_ref.dtype)


def _std_map_ctiled_kernel(x_ref, o_ref, sum_ref, sq_ref, *, c_total):
    """Channel-tiled std: running sum / sum-of-squares over an 'arbitrary' c axis."""
    ci = pl.program_id(2)

    @pl.when(ci == 0)
    def _():
        sum_ref[...] = jnp.zeros_like(sum_ref)
        sq_ref[...] = jnp.zeros_like(sq_ref)

    x = x_ref[...].astype(jnp.float32)            # (1, c_blk, S_BLK, 128)
    sum_ref[...] += jnp.sum(x, axis=1)
    sq_ref[...] += jnp.sum(x * x, axis=1)

    @pl.when(ci == pl.num_programs(2) - 1)
    def _():
        inv_n = 1.0 / c_total
        inv_nm1 = 1.0 / (c_total - 1) if c_total > 1 else float("nan")
        s = sum_ref[...]
        var = (sq_ref[...] - s * s * inv_n) * inv_nm1
        var = jnp.maximum(var, 0.0)               # guard tiny f32 cancellation
        o_ref[...] = jnp.sqrt(var).astype(o_ref.dtype)


def std_map(x, *, min_pallas_bytes=_SMALL_INPUT_BYTES, block_f32_bytes=_BLOCK_F32_BYTES):
    """Standard deviation over dim 1 of a [B, C, ...] tensor -> [B, ...].

    Matches torch.std(x, dim=1) (unbiased, ddof=1).
    """
    assert x.ndim > 2, "input must have at least three dims"
    if not jnp.issubdtype(x.dtype, jnp.floating):
        x = x.astype(jnp.float32)

    B, C = x.shape[0], x.shape[1]
    spatial = x.shape[2:]
    HW = math.prod(spatial)
    out_dtype = x.dtype
    itemsize = jnp.dtype(x.dtype).itemsize

    # Small-input fast path: launch + per-grid-step overhead dominates for toy shapes.
    if x.size * itemsize < min_pallas_bytes:
        return jnp.std(x, axis=1, ddof=1).astype(out_dtype)

    # Flatten spatial onto a lane-dense layout: HW -> (S rows) x (128 lanes).
    S = -(-HW // _LANE)
    rows_budget = block_f32_bytes // (C * _LANE * 4)   # may be 0 for huge C

    use_ctiled = False
    if S <= rows_budget:
        # Single spatial block per batch item (block dim == full array dim is legal).
        s_blk = s_pad = S
    elif rows_budget >= _SUBLANE:
        # Tile spatial; the sublane block dim must be a multiple of 8.
        s_blk = (rows_budget // _SUBLANE) * _SUBLANE
        s_pad = -(-S // s_blk) * s_blk
    else:
        # C too large for a whole-channel block: tile the channel reduction onto
        # an "arbitrary" grid axis with sum / sum-of-squares VMEM accumulators.
        use_ctiled = True
        s_blk = min(-(-S // _SUBLANE) * _SUBLANE, 256)
        s_pad = -(-S // s_blk) * s_blk
        c_blk = min(C, max(1, block_f32_bytes // (s_blk * _LANE * 4)))
        c_pad = -(-C // c_blk) * c_blk

    hw_pad = s_pad * _LANE
    xf = x.reshape(B, C, HW)
    if hw_pad != HW:
        xf = jnp.pad(xf, ((0, 0), (0, 0), (0, hw_pad - HW)))
    x4 = xf.reshape(B, C, s_pad, _LANE)

    if not use_ctiled:
        out = pl.pallas_call(
            _std_map_kernel,
            out_shape=jax.ShapeDtypeStruct((B, s_pad, _LANE), out_dtype),
            grid=(B, s_pad // s_blk),
            in_specs=[pl.BlockSpec((1, C, s_blk, _LANE), lambda b, t: (b, 0, t, 0))],
            out_specs=pl.BlockSpec((1, s_blk, _LANE), lambda b, t: (b, t, 0)),
            compiler_params=pltpu.CompilerParams(
                dimension_semantics=("parallel", "parallel"),
                vmem_limit_bytes=_VMEM_LIMIT_BYTES,
            ),
        )(x4)
    else:
        if c_pad != C:
            # Zero-padded channels contribute nothing to sum / sum-of-squares;
            # the kernel normalizes by the true channel count C.
            x4 = jnp.pad(x4, ((0, 0), (0, c_pad - C), (0, 0), (0, 0)))
        kernel = functools.partial(_std_map_ctiled_kernel, c_total=C)
        out = pl.pallas_call(
            kernel,
            out_shape=jax.ShapeDtypeStruct((B, s_pad, _LANE), out_dtype),
            grid=(B, s_pad // s_blk, c_pad // c_blk),
            in_specs=[pl.BlockSpec((1, c_blk, s_blk, _LANE),
                                   lambda b, t, ci: (b, ci, t, 0))],
            out_specs=pl.BlockSpec((1, s_blk, _LANE), lambda b, t, ci: (b, t, 0)),
            scratch_shapes=[pltpu.VMEM((1, s_blk, _LANE), jnp.float32),
                            pltpu.VMEM((1, s_blk, _LANE), jnp.float32)],
            compiler_params=pltpu.CompilerParams(
                dimension_semantics=("parallel", "parallel", "arbitrary"),
                vmem_limit_bytes=_VMEM_LIMIT_BYTES,
            ),
        )(x4)

    out = out.reshape(B, hw_pad)[:, :HW]
    return out.reshape((B,) + spatial)


if __name__ == "__main__":
    k0, k1 = jax.random.split(jax.random.PRNGKey(0))

    # --- Main path: whole-channel block, two-pass std -------------------------
    B, C, H, W = 2, 4, 16, 16
    x = jax.random.uniform(k0, (B, C, H, W), dtype=jnp.float32)  # positive (post-ReLU style)
    ref = jnp.std(x, axis=1, ddof=1)

    out = jax.block_until_ready(std_map(x, min_pallas_bytes=0))  # force Pallas at this tiny shape
    assert out.shape == (B, H, W)
    assert jnp.allclose(out, ref, atol=1e-5, rtol=1e-5), "mismatch vs reference"

    # Default dispatch (tiny input -> XLA fast path) must agree too.
    out_fast = jax.block_until_ready(std_map(x))
    assert jnp.allclose(out_fast, ref, atol=1e-5, rtol=1e-5), "fast-path mismatch"

    # --- Channel-tiled accumulator path (forced here via a tiny block budget;
    #     in production it triggers only for very large C) ---------------------
    B2, C2, H2, W2 = 2, 5, 30, 30
    x2 = jax.random.uniform(k1, (B2, C2, H2, W2), dtype=jnp.float32)
    ref2 = jnp.std(x2, axis=1, ddof=1)
    out2 = jax.block_until_ready(std_map(x2, min_pallas_bytes=0, block_f32_bytes=8192))
    assert out2.shape == (B2, H2, W2)
    assert jnp.allclose(out2, ref2, atol=1e-5, rtol=1e-4), "ctiled-path mismatch"

    print("KERNEL_OK")
</pallas_src>

<mosaic_0001>
module attributes {stable_mosaic.version = 11 : i64} {
  func.func @_std_map_kernel(%arg0: i32, %arg1: i32, %arg2: memref<1x4x2x128xf32, #tpu.memory_space<vmem>>, %arg3: memref<1x2x128xf32, #tpu.memory_space<vmem>>) attributes {dimension_semantics = [#tpu.dimension_semantics<parallel>, #tpu.dimension_semantics<parallel>], iteration_bounds = array<i64: 2, 1>, scalar_prefetch = 0 : i64, scratch_operands = 0 : i64, tpu.core_type = #tpu.core_type<tc>, window_params = [{transform_indices = @transform_0, window_bounds = array<i64: 1, 4, 2, 128>}, {transform_indices = @transform_1, window_bounds = array<i64: 1, 2, 128>}]} {
    %c0 = arith.constant 0 : index
    %c0_0 = arith.constant 0 : index
    %c0_1 = arith.constant 0 : index
    %c0_2 = arith.constant 0 : index
    %0 = vector.load %arg2[%c0, %c0_0, %c0_1, %c0_2] : memref<1x4x2x128xf32, #tpu.memory_space<vmem>>, vector<1x4x2x128xf32>
    %cst = arith.constant dense<0.000000e+00> : vector<1x2x128xf32>
    %1 = vector.multi_reduction <add>, %0, %cst [1] : vector<1x4x2x128xf32> to vector<1x2x128xf32>
    %2 = vector.shape_cast %1 : vector<1x2x128xf32> to vector<1x1x2x128xf32>
    %cst_3 = arith.constant 4.000000e+00 : f32
    %3 = vector.broadcast %cst_3 : f32 to vector<1x1x2x128xf32>
    %4 = arith.divf %2, %3 : vector<1x1x2x128xf32>
    %5 = vector.broadcast %4 : vector<1x1x2x128xf32> to vector<1x4x2x128xf32>
    %6 = arith.subf %0, %5 : vector<1x4x2x128xf32>
    %7 = arith.mulf %6, %6 : vector<1x4x2x128xf32>
    %cst_4 = arith.constant dense<0.000000e+00> : vector<1x2x128xf32>
    %8 = vector.multi_reduction <add>, %7, %cst_4 [1] : vector<1x4x2x128xf32> to vector<1x2x128xf32>
    %cst_5 = arith.constant 0.333333343 : f32
    %9 = vector.broadcast %cst_5 : f32 to vector<1x2x128xf32>
    %10 = arith.mulf %8, %9 : vector<1x2x128xf32>
    %11 = math.sqrt %10 : vector<1x2x128xf32>
    %c0_6 = arith.constant 0 : index
    %c0_7 = arith.constant 0 : index
    %c0_8 = arith.constant 0 : index
    %12 = vector.load %arg3[%c0_6, %c0_7, %c0_8] : memref<1x2x128xf32, #tpu.memory_space<vmem>>, vector<1x2x128xf32>
    tpu.vector_store %arg3[%c0_6, %c0_7, %c0_8], %11 {strides = array<i32>} : memref<1x2x128xf32, #tpu.memory_space<vmem>>, vector<1x2x128xf32>,
    return
  }
  func.func @transform_0(%arg0: i32, %arg1: i32) -> (i32, i32, i32, i32) {
    %c0_i32 = arith.constant 0 : i32
    %c0_i32_0 = arith.constant 0 : i32
    %c0_i32_1 = arith.constant 0 : i32
    return %arg0, %c0_i32, %arg1, %c0_i32_0 : i32, i32, i32, i32
  }
  func.func @transform_1(%arg0: i32, %arg1: i32) -> (i32, i32, i32) {
    %c0_i32 = arith.constant 0 : i32
    %c0_i32_0 = arith.constant 0 : i32
    return %arg0, %arg1, %c0_i32 : i32, i32, i32
  }
}

</mosaic_0001>

<llo_original>
// kernel: tpu_custom_call.1
$region0: #{tpu_custom_call.1}
  #allocation0 [shape = 'u32[]', space=smem, size = 0x4, offset = 0x4, fixed_abs, tag = 'smem constant byte address 0x4 - core index']
  #allocation1 [shape = 'u32[144,128]{1,0:T(1,128)}', space=vmem, size = 0x12000, scoped, tag = 'internal scratch']
  %s0 = inlined_call_operand.hbm [shape: f32[2,4,2,128], index: 0, kind: input, shape index: {}]
  %s1 = inlined_call_operand.hbm [shape: f32[2,2,128], index: 1, kind: output, shape index: {}]
  %s2 = sld [smem:[#allocation0]]
  $region41: #{tpu_custom_call.1} parent=0
    _
  %s4 = ssub.s32 1, %s2
  %s5 = scalar_select 0, %s4, %s2
  $region1: #{tpu_custom_call.1} parent=0
    #allocation2 [shape = 'u8[8192]{0}', space=vmem, size = 0x2000, scoped, tag = 'input window, operand 0']
    #allocation3 [shape = 's32[2]{0}', space=sflag, size = 0x8, scoped, tag = 'scoped memory for tpu_custom_call.1']
    #allocation4 [shape = 's32[2]{0}', space=sflag, size = 0x8, scoped, tag = 'scoped memory for tpu_custom_call.1']
    #allocation5 [shape = 'u8[2048]{0}', space=vmem, size = 0x800, scoped, tag = 'output window, operand 0']
    %6 = vsyncpa [#allocation3], 0
    %s7 = scalar_lea.sflag [#allocation3], 1
    %8 = vsyncpa %s7, 0
    %9 = vsyncpa [#allocation4], 0
    %s10 = scalar_lea.sflag [#allocation4], 1
    %11 = vsyncpa %s10, 0
    loop: start=0, step=1, limit=4
    $region2: #{tpu_custom_call.1} parent=1 // loop_pre_header
      _
    $region3: #{tpu_custom_call.1} parent=1 // loop_header
      %s13 = sphi 0, %s17
      %p14 = scmp.ge.s32.totalorder %s13, 4
      %s20 = sphi 0, %s32
      %s21 = sphi 0, %s28
      %s22 = sphi 0, %s20
      %s23 = sphi 0, %s21
      %s24 = sphi 0, %s22
      %s25 = sphi 0, %s23
      %s37 = sphi 0, %s39
      %s40 = sphi 0, %s37
      %s41 = sphi 0, %s40
      %s57 = sphi 0, %s41
      %s65 = sphi 0, %s67
      %s68 = sphi 0, %s65
      %s69 = sphi 0, %s68
      %s85 = sphi 0, %s69
    $region4: #{tpu_custom_call.1} parent=1 // loop_header_branch
      %16 = sbr.rel (%p14) target = $region8
    $region5: #{tpu_custom_call.1} parent=1 // loop_body
      %s18 = ssub.s32 %s13, 1
      %s19 = ssub.s32 %s13, 2
      %s26 = sadd.s32 1, %s21
      %p27 = scmp.ge.s32.totalorder %s26, 1
      %s28 = scalar_select %p27, 0, %s26
      %s29 = sadd.s32 1, %s20
      %s30 = scalar_select %p27, %s29, %s20
      %p31 = scmp.ge.s32.totalorder %s30, 2
      %s32 = scalar_select %p31, 0, %s30
      %s33 = ssub.s32 %s20, %s32
      %s34 = ssub.s32 %s21, %s28
      %s35 = sor.u32 %s33, %s34
      %p36 = scmp.eq.s32.totalorder %s35, 0
      %s38 = sadd.s32 %s37, 1
      %s39 = scalar_select %p36, %s37, %s38
      %p42 = pneg %p36
      %p43 = scmp.eq.s32.totalorder %s13, 1
      %p44 = por %p42, %p43
      %p45 = scmp.ne.s32.totalorder %s37, %s40
      %p46 = scmp.eq.s32.totalorder %s13, 0
      %p47 = por %p45, %p46
      %p48 = scmp.ne.s32.totalorder %s37, %s40
      %p49 = scmp.eq.s32.totalorder %s18, 1
      %p50 = por %p48, %p49
      %p51 = scmp.ne.s32.totalorder %s40, %s41
      %p52 = scmp.eq.s32.totalorder %s18, 0
      %p53 = por %p51, %p52
      %p54 = scmp.ne.s32.totalorder %s40, %s41
      %p55 = scmp.eq.s32.totalorder %s19, 1
      %p56 = por %p54, %p55
      %p58 = scmp.ne.s32.totalorder %s41, %s57
      %p59 = scmp.eq.s32.totalorder %s19, 0
      %p60 = por %p58, %p59
      %s61 = ssub.s32 %s20, %s32
      %s62 = ssub.s32 %s21, %s28
      %s63 = sor.u32 %s61, %s62
      %p64 = scmp.eq.s32.totalorder %s63, 0
      %s66 = sadd.s32 %s65, 1
      %s67 = scalar_select %p64, %s65, %s66
      %p70 = pneg %p64
      %p71 = scmp.eq.s32.totalorder %s13, 1
      %p72 = por %p70, %p71
      %p73 = scmp.ne.s32.totalorder %s65, %s68
      %p74 = scmp.eq.s32.totalorder %s13, 0
      %p75 = por %p73, %p74
      %p76 = scmp.ne.s32.totalorder %s65, %s68
      %p77 = scmp.eq.s32.totalorder %s18, 1
      %p78 = por %p76, %p77
      %p79 = scmp.ne.s32.totalorder %s68, %s69
      %p80 = scmp.eq.s32.totalorder %s18, 0
      %p81 = por %p79, %p80
      %p82 = scmp.ne.s32.totalorder %s68, %s69
      %p83 = scmp.eq.s32.totalorder %s19, 1
      %p84 = por %p82, %p83
      %p86 = scmp.ne.s32.totalorder %s69, %s85
      %p87 = scmp.eq.s32.totalorder %s19, 0
      %p88 = por %p86, %p87
      %p89 = scmp.le.s32.totalorder 1, %s13
      %p90 = scmp.lt.s32.totalorder %s13, 3
      %p91 = pnand %p89, %p90
      %p92 = pneg %p91
      // Predicated region
      $region9: #{tpu_custom_call.1} parent=5 // pred_check
        _
      $region10: #{tpu_custom_call.1} parent=5 // pred_check_branch
        %94 = sbr.rel (%p91) target = $region12
      $region11: #{tpu_custom_call.1} parent=5 // pred_region
        %s95 = ssub.s32 %s13, 1
      $region12: #{tpu_custom_call.1} parent=5 // pred_fallthru
        _
      %p96 = scmp.lt.s32.totalorder %s13, 2
      // Predicated region
      $region13: #{tpu_custom_call.1} parent=5 // pred_check
        %p97 = pneg %p96
      $region14: #{tpu_custom_call.1} parent=5 // pred_check_branch
        %99 = sbr.rel (%p97) target = $region16
      $region15: #{tpu_custom_call.1} parent=5 // pred_region
        // Predicated region
        $region17: #{tpu_custom_call.1} parent=15 // pred_check
          %p100 = pneg %p47
        $region18: #{tpu_custom_call.1} parent=15 // pred_check_branch
          %102 = sbr.rel (%p100) target = $region20
        $region19: #{tpu_custom_call.1} parent=15 // pred_region
          %s103 = sand.u32 %s37, 1
          %s104 = scalar_lea.sflag [#allocation3], %s103
          %s105 = sand.u32 %s37, 1
          %s106 = smul.addr %s105, 8
          %s107 = scalar_lea.vmem [#allocation2], %s106
          %s109 = ssub.s32 128, 128
          %110 = vsyncadd %s104, %s109
          %s111 = smul.addr %s20, 4
          %s112 = sadd.s32 %s21, %s111
          %s113 = smul.addr %s112, 32
          %s114 = scalar_lea.hbm %s0, %s113
          %s115 = sshll.u32 %s107, 4
          %s116 = int_to_ptr.vmem [resolvable:$true] %s115
          %121 = dma.hbm_to_vmem [thread:$0]  %s114, 128, %s116, %s104, 32, 32, 2
        $region20: #{tpu_custom_call.1} parent=15 // pred_fallthru
          _
      $region16: #{tpu_custom_call.1} parent=5 // pred_fallthru
        _
      %p122 = scmp.le.s32.totalorder 1, %s13
      %p123 = scmp.lt.s32.totalorder %s13, 3
      %p124 = pnand %p122, %p123
      %p125 = pneg %p124
      // Predicated region
      $region21: #{tpu_custom_call.1} parent=5 // pred_check
        _
      $region22: #{tpu_custom_call.1} parent=5 // pred_check_branch
        %127 = sbr.rel (%p124) target = $region24
      $region23: #{tpu_custom_call.1} parent=5 // pred_region
        %s128 = ssub.s32 %s13, 1
        %s129 = sand.u32 %s40, 1
        %s130 = scalar_lea.sflag [#allocation3], %s129
        %s131 = sand.u32 %s40, 1
        %s132 = smul.addr %s131, 8
        %s133 = scalar_lea.vmem [#allocation2], %s132
        // Predicated region
        $region25: #{tpu_custom_call.1} parent=23 // pred_check
          %p134 = pneg %p53
        $region26: #{tpu_custom_call.1} parent=23 // pred_check_branch
          %136 = sbr.rel (%p134) target = $region28
        $region27: #{tpu_custom_call.1} parent=23 // pred_region
          %137 = dma.done %s130, 128
        $region28: #{tpu_custom_call.1} parent=23 // pred_fallthru
          _
        %s138 = sand.u32 %s40, 1
        %s139 = scalar_lea.sflag [#allocation3], %s138
        %s140 = sand.u32 %s40, 1
        %s141 = smul.addr %s140, 8
        %s142 = scalar_lea.vmem [#allocation2], %s141
        %p143 = pneg %p53
        %p144 = pneg %p50
        %p145 = pneg %p81
        %p146 = pneg %p78
        %s147 = sand.u32 %s68, 1
        %s148 = scalar_lea.sflag [#allocation4], %s147
        %s149 = sand.u32 %s68, 1
        %s150 = smul.addr %s149, 2
        %s151 = scalar_lea.vmem [#allocation5], %s150
        %v152 = vld [vmem:[%s133] sm:$0x3]
        %v153 = vld [vmem:[%s133 + $0x2] sm:$0x3]
        %v154 = vld [vmem:[%s133 + $0x4] sm:$0x3]
        %v155 = vld [vmem:[%s133 + $0x6] sm:$0x3]
        %vm156 = vcmask 1041408
        %v157 = vsel %vm156, %v152, 0.0
        %v158 = vsel %vm156, %v153, 0.0
        %v159 = vadd.f32 %v157, %v158
        %v160 = vsel %vm156, %v154, 0.0
        %v161 = vadd.f32 %v159, %v160
        %v162 = vsel %vm156, %v155, 0.0
        %v163 = vadd.f32 %v161, %v162
        %v164 = vrcp.pop 4.0
        %v165 = vmul.f32 %v163, %v164
        %v166 = vsub.f32 %v152, %v165
        %v167 = vsub.f32 %v153, %v165
        %v168 = vsub.f32 %v154, %v165
        %v169 = vsub.f32 %v155, %v165
        %v170 = vmul.f32 %v166, %v166
        %v171 = vmul.f32 %v167, %v167
        %v172 = vmul.f32 %v168, %v168
        %v173 = vmul.f32 %v169, %v169
        %v174 = vsel %vm156, %v170, 0.0
        %v175 = vsel %vm156, %v171, 0.0
        %v176 = vadd.f32 %v174, %v175
        %v177 = vsel %vm156, %v172, 0.0
        %v178 = vadd.f32 %v176, %v177
        %v179 = vsel %vm156, %v173, 0.0
        %v180 = vadd.f32 %v178, %v179
        %v181 = vmul.f32 %v180, 0.33333334
        %v182 = vrsqrt.pop %v181
        %v183 = vmul.f32 %v181, %v182
        %vm184 = vcmp.eq.f32.partialorder %v181, inf
        %v185 = vsel %vm184, %v181, %v183
        %vm186 = vcmp.eq.f32.partialorder %v181, 0.0
        %v187 = vand.u32 %v181, 2147483648
        %v188 = vsel %vm186, %v187, %v185
        %189 = vst [vmem:[%s151] sm:$0x3] %v188
        %s190 = sand.u32 %s68, 1
        %s191 = scalar_lea.sflag [#allocation4], %s190
        %s192 = sand.u32 %s68, 1
        %s193 = smul.addr %s192, 2
        %s194 = scalar_lea.vmem [#allocation5], %s193
        // Predicated region
        $region29: #{tpu_custom_call.1} parent=23 // pred_check
          %p195 = pneg %p78
        $region30: #{tpu_custom_call.1} parent=23 // pred_check_branch
          %197 = sbr.rel (%p195) target = $region32
        $region31: #{tpu_custom_call.1} parent=23 // pred_region
          %s199 = ssub.s32 32, 32
          %200 = vsyncadd %s191, %s199
          %s201 = sadd.s32 %s23, %s22
          %s202 = smul.addr %s201, 32
          %s203 = scalar_lea.hbm %s1, %s202
          %s205 = sshll.u32 %s194, 4
          %s206 = int_to_ptr.vmem [resolvable:$true] %s205
          %208 = dma.vmem_to_hbm [thread:$0]  %s206, 32, %s203, %s191
        $region32: #{tpu_custom_call.1} parent=23 // pred_fallthru
          _
      $region24: #{tpu_custom_call.1} parent=5 // pred_fallthru
        _
      %p209 = scmp.le.s32.totalorder 2, %s13
      // Predicated region
      $region33: #{tpu_custom_call.1} parent=5 // pred_check
        %p210 = pneg %p209
      $region34: #{tpu_custom_call.1} parent=5 // pred_check_branch
        %212 = sbr.rel (%p210) target = $region36
      $region35: #{tpu_custom_call.1} parent=5 // pred_region
        %s213 = ssub.s32 %s13, 2
        // Predicated region
        $region37: #{tpu_custom_call.1} parent=35 // pred_check
          %p214 = pneg %p84
        $region38: #{tpu_custom_call.1} parent=35 // pred_check_branch
          %216 = sbr.rel (%p214) target = $region40
        $region39: #{tpu_custom_call.1} parent=35 // pred_region
          %s217 = sand.u32 %s69, 1
          %s218 = scalar_lea.sflag [#allocation4], %s217
          %s219 = sand.u32 %s69, 1
          %s220 = smul.addr %s219, 2
          %s221 = scalar_lea.vmem [#allocation5], %s220
          %222 = dma.done %s218, 32
        $region40: #{tpu_custom_call.1} parent=35 // pred_fallthru
          _
      $region36: #{tpu_custom_call.1} parent=5 // pred_fallthru
        _
    $region6: #{tpu_custom_call.1} parent=1 // loop_footer
      %s17 = sadd.s32 1, %s13
    $region7: #{tpu_custom_call.1} parent=1 // loop_footer_branch
      %12 = sbr.rel target = $region3
    $region8: #{tpu_custom_call.1} parent=1 // loop_exit
      _
    %223 = vsyncpa [#allocation3], 1
    %s224 = scalar_lea.sflag [#allocation3], 1
    %225 = vsyncpa %s224, 1
    %226 = vsyncpa [#allocation4], 1
    %s227 = scalar_lea.sflag [#allocation4], 1
    %228 = vsyncpa %s227, 1

</llo_original>
